<compile_context>
chip_gen: v6e
topology: v6e:2x2x1
jax: 0.10.0
libtpu: 0.0.40
codegen_flags: <defaults>
</compile_context>

<pallas_src>
import math

import jax
import jax.numpy as jnp
from jax.experimental import pallas as pl
from jax.experimental.pallas import tpu as pltpu


OUT_CLASSES = 2     # nn.Linear(32, 2)
OUT_PAD = 8         # final-layer lane pad (block last dim == full array dim -> legal)
LANE = 128          # lane-dense padding target for intermediate activations
SUBLANE = 16        # bf16 sublane packing -> batch tiles aligned to 16 rows


# ---------------------------------------------------------------------------
# Pallas kernel: fused 6-layer MLP (concat order pre-folded into W0)
# ---------------------------------------------------------------------------
def _sim_mlp_kernel(e1_ref, e2_ref,
                    w0_ref, b0_ref,
                    w1_ref, b1_ref,
                    w2_ref, b2_ref,
                    w3_ref, b3_ref,
                    w4_ref, b4_ref,
                    w5_ref, b5_ref,
                    o_ref,
                    cat_ref):
    H = e1_ref.shape[1]

    # Stage [enc1 | enc2] into a (tm, 2H) bf16 scratch (two lane-offset stores),
    # then do a single K=2H matmul.  The coin-flip concat order was folded into
    # W0 by swapping its row halves in the wrapper, so the kernel is static.
    cat_ref[:, :H] = e1_ref[...]
    cat_ref[:, H:] = e2_ref[...]

    def linear(x, w_ref, b_ref, relu=True):
        y = jnp.dot(x, w_ref[...], preferred_element_type=jnp.float32) + b_ref[...]
        return jnp.maximum(y, 0.0) if relu else y

    h = linear(cat_ref[...], w0_ref, b0_ref)                          # 2H  -> 128 (padded H)
    h = linear(h.astype(jnp.bfloat16), w1_ref, b1_ref)                # 128 -> 256
    h = linear(h.astype(jnp.bfloat16), w2_ref, b2_ref)                # 256 -> 128
    h = linear(h.astype(jnp.bfloat16), w3_ref, b3_ref)                # 128 -> 128 (padded 64)
    h = linear(h.astype(jnp.bfloat16), w4_ref, b4_ref)                # 128 -> 128 (padded 32)
    out = linear(h.astype(jnp.bfloat16), w5_ref, b5_ref, relu=False)  # 128 -> 8   (padded 2)
    o_ref[...] = out.astype(o_ref.dtype)


# ---------------------------------------------------------------------------
# Tiling policy
# ---------------------------------------------------------------------------
def _pick_tile(B, block_m):
    """Batch tile: minimal padding (<= SUBLANE-1 extra rows per tile), >= 2 grid
    steps whenever the batch can be split (v7x megacore has 2 TensorCores)."""
    n_tiles = max(1, math.ceil(B / block_m))
    if n_tiles == 1 and B >= 2 * SUBLANE:
        n_tiles = 2
    tm = math.ceil(B / n_tiles)
    tm = ((tm + SUBLANE - 1) // SUBLANE) * SUBLANE
    Bp = math.ceil(B / tm) * tm
    return tm, Bp


def _whole_spec(shape):
    # whole-array block, constant block index -> stays VMEM-resident across grid
    return pl.BlockSpec(shape, lambda i: (0,) * len(shape))


def sim_mlp_pallas(enc1, enc2, params, block_m=1024):
    """enc1/enc2: (B, H) bf16; params: 6 x (W:(in,out) bf16, b:(1,out) f32),
    already lane-padded by prep_params and concat-order-folded for layer 0."""
    B, H = enc1.shape
    tm, Bp = _pick_tile(B, block_m)
    if Bp != B:
        pad = ((0, Bp - B), (0, 0))
        enc1 = jnp.pad(enc1, pad)
        enc2 = jnp.pad(enc2, pad)

    flat, in_specs = [], []
    in_specs.append(pl.BlockSpec((tm, H), lambda i: (i, 0)))   # enc1
    in_specs.append(pl.BlockSpec((tm, H), lambda i: (i, 0)))   # enc2
    for (w, b) in params:
        flat += [w, b]
        in_specs += [_whole_spec(w.shape), _whole_spec(b.shape)]

    # Advisory cost estimate for XLA's scheduler.
    flops = 0
    bytes_accessed = 2 * Bp * H * enc1.dtype.itemsize + Bp * OUT_PAD * 4
    for (w, b) in params:
        flops += 2 * Bp * int(w.shape[0]) * int(w.shape[1])
        bytes_accessed += int(w.size) * w.dtype.itemsize + int(b.size) * b.dtype.itemsize
    ce = pl.CostEstimate(flops=int(flops), transcendentals=0,
                         bytes_accessed=int(bytes_accessed))

    out = pl.pallas_call(
        _sim_mlp_kernel,
        out_shape=jax.ShapeDtypeStruct((Bp, OUT_PAD), jnp.float32),
        grid_spec=pltpu.PrefetchScalarGridSpec(
            num_scalar_prefetch=0,
            grid=(Bp // tm,),
            in_specs=in_specs,
            out_specs=pl.BlockSpec((tm, OUT_PAD), lambda i: (i, 0)),
            scratch_shapes=[pltpu.VMEM((tm, 2 * H), jnp.bfloat16)],
        ),
        compiler_params=pltpu.CompilerParams(
            dimension_semantics=("parallel",)),
        cost_estimate=ce,
    )(enc1, enc2, *flat)

    return out[:B, :OUT_CLASSES]


# ---------------------------------------------------------------------------
# Parameter construction (mirrors nn.Linear shapes/init in __init__)
# ---------------------------------------------------------------------------
def make_params(hidden_size, key):
    dims = [2 * hidden_size, hidden_size, 256, 128, 64, 32, OUT_CLASSES]
    params = []
    for i in range(len(dims) - 1):
        key, wk, bk = jax.random.split(key, 3)
        fan_in, fan_out = dims[i], dims[i + 1]
        bound = float(fan_in) ** -0.5
        w = jax.random.uniform(wk, (fan_in, fan_out), jnp.float32, -bound, bound)
        b = jax.random.uniform(bk, (1, fan_out), jnp.float32, -bound, bound)
        params.append((w, b))
    return params


def prep_params(params, lane=LANE, out_pad=OUT_PAD):
    """Kernel layout: weights bf16, biases f32.  Intermediate output dims are
    zero-padded to lane-dense multiples of 128 (next layer's extra input rows are
    zero rows; ReLU(0)=0 keeps the math exact).  Final layer padded to OUT_PAD."""
    n = len(params)
    prepped = []
    prev_out = None
    for idx, (w, b) in enumerate(params):
        in_dim, out_dim = w.shape
        if idx > 0 and prev_out is not None and prev_out > in_dim:
            w = jnp.pad(w, ((0, prev_out - in_dim), (0, 0)))
        tgt = out_pad if idx == n - 1 else max(lane, math.ceil(out_dim / lane) * lane)
        if tgt > out_dim:
            w = jnp.pad(w, ((0, 0), (0, tgt - out_dim)))
            b = jnp.pad(b, ((0, 0), (0, tgt - out_dim)))
        prev_out = tgt
        prepped.append((w.astype(jnp.bfloat16), b.astype(jnp.float32)))
    return prepped


# ---------------------------------------------------------------------------
# Forward wrapper (matches SimilarityDiscriminator.forward)
# ---------------------------------------------------------------------------
def similarity_discriminator_forward(enc1, enc2, kernel_params, order_key, block_m=1024):
    # PyTorch flips the concat order with prob 0.5 (np.random.uniform); reproduced
    # deterministically with a JAX PRNG draw.  The flip is folded into W0 by
    # swapping its two row halves (a tiny (2H, H) select), so the kernel itself
    # always computes cat(enc1, enc2) @ W0'.
    H = enc1.shape[1]
    u = jax.random.uniform(order_key, ())
    swap = u < 0.5   # True -> cat(enc2, enc1)
    (w0, b0), rest = kernel_params[0], kernel_params[1:]
    w0_ordered = jnp.where(swap,
                           jnp.concatenate([w0[H:], w0[:H]], axis=0),
                           w0)
    params = [(w0_ordered, b0)] + list(rest)
    return sim_mlp_pallas(enc1.astype(jnp.bfloat16), enc2.astype(jnp.bfloat16),
                          params, block_m=block_m)


# ---------------------------------------------------------------------------
# Pure-JAX reference (f32) for correctness check
# ---------------------------------------------------------------------------
def _ref_forward(enc1, enc2, params_f32, swap):
    enc = jnp.where(swap,
                    jnp.concatenate([enc2, enc1], axis=1),
                    jnp.concatenate([enc1, enc2], axis=1))
    h = enc
    for i, (w, b) in enumerate(params_f32):
        h = h @ w + b
        if i < len(params_f32) - 1:
            h = jnp.maximum(h, 0.0)
    return h


if __name__ == "__main__":
    key = jax.random.PRNGKey(0)
    k_param, k_e1, k_e2, k_order = jax.random.split(key, 4)

    hidden_size = 32
    batch = 8

    params_f32 = make_params(hidden_size, k_param)
    kernel_params = prep_params(params_f32)

    enc1 = jax.random.normal(k_e1, (batch, hidden_size), jnp.float32)
    enc2 = jax.random.normal(k_e2, (batch, hidden_size), jnp.float32)

    out = similarity_discriminator_forward(enc1, enc2, kernel_params, k_order)
    out = jax.block_until_ready(out)

    # sanity: shape (batch, 2), finite values
    assert out.shape == (batch, OUT_CLASSES)
    assert bool(jnp.all(jnp.isfinite(out)))

    # correctness vs f32 reference (same coin flip); tolerance covers bf16 weights/acts
    u = jax.random.uniform(k_order, ())
    swap = u < 0.5
    ref = _ref_forward(enc1, enc2, params_f32, swap)
    assert bool(jnp.allclose(out, ref, atol=1e-1, rtol=1e-1)), (
        float(jnp.max(jnp.abs(out - ref))))

    print("KERNEL_OK")
</pallas_src>

<mosaic_0001>
module attributes {stable_mosaic.version = 11 : i64} {
  func.func @_sim_mlp_kernel(%arg0: i32, %arg1: memref<16x32xbf16, #tpu.memory_space<vmem>>, %arg2: memref<16x32xbf16, #tpu.memory_space<vmem>>, %arg3: memref<64x128xbf16, #tpu.memory_space<vmem>>, %arg4: memref<1x128xf32, #tpu.memory_space<vmem>>, %arg5: memref<128x256xbf16, #tpu.memory_space<vmem>>, %arg6: memref<1x256xf32, #tpu.memory_space<vmem>>, %arg7: memref<256x128xbf16, #tpu.memory_space<vmem>>, %arg8: memref<1x128xf32, #tpu.memory_space<vmem>>, %arg9: memref<128x128xbf16, #tpu.memory_space<vmem>>, %arg10: memref<1x128xf32, #tpu.memory_space<vmem>>, %arg11: memref<128x128xbf16, #tpu.memory_space<vmem>>, %arg12: memref<1x128xf32, #tpu.memory_space<vmem>>, %arg13: memref<128x8xbf16, #tpu.memory_space<vmem>>, %arg14: memref<1x8xf32, #tpu.memory_space<vmem>>, %arg15: memref<16x8xf32, #tpu.memory_space<vmem>>, %arg16: memref<16x64xbf16, #tpu.memory_space<vmem>>) attributes {dimension_semantics = [#tpu.dimension_semantics<parallel>], iteration_bounds = array<i64: 1>, scalar_prefetch = 0 : i64, scratch_operands = 1 : i64, tpu.core_type = #tpu.core_type<tc>, window_params = [{transform_indices = @transform_0, window_bounds = array<i64: 16, 32>}, {transform_indices = @transform_1, window_bounds = array<i64: 16, 32>}, {pipeline_mode = #tpu.pipeline_mode<synchronous>, transform_indices = @transform_2, window_bounds = array<i64: 64, 128>}, {pipeline_mode = #tpu.pipeline_mode<synchronous>, transform_indices = @transform_3, window_bounds = array<i64: 1, 128>}, {pipeline_mode = #tpu.pipeline_mode<synchronous>, transform_indices = @transform_4, window_bounds = array<i64: 128, 256>}, {pipeline_mode = #tpu.pipeline_mode<synchronous>, transform_indices = @transform_5, window_bounds = array<i64: 1, 256>}, {pipeline_mode = #tpu.pipeline_mode<synchronous>, transform_indices = @transform_6, window_bounds = array<i64: 256, 128>}, {pipeline_mode = #tpu.pipeline_mode<synchronous>, transform_indices = @transform_7, window_bounds = array<i64: 1, 128>}, {pipeline_mode = #tpu.pipeline_mode<synchronous>, transform_indices = @transform_8, window_bounds = array<i64: 128, 128>}, {pipeline_mode = #tpu.pipeline_mode<synchronous>, transform_indices = @transform_9, window_bounds = array<i64: 1, 128>}, {pipeline_mode = #tpu.pipeline_mode<synchronous>, transform_indices = @transform_10, window_bounds = array<i64: 128, 128>}, {pipeline_mode = #tpu.pipeline_mode<synchronous>, transform_indices = @transform_11, window_bounds = array<i64: 1, 128>}, {pipeline_mode = #tpu.pipeline_mode<synchronous>, transform_indices = @transform_12, window_bounds = array<i64: 128, 8>}, {pipeline_mode = #tpu.pipeline_mode<synchronous>, transform_indices = @transform_13, window_bounds = array<i64: 1, 8>}, {transform_indices = @transform_14, window_bounds = array<i64: 16, 8>}]} {
    %c0 = arith.constant 0 : index
    %c0_0 = arith.constant 0 : index
    %0 = vector.load %arg1[%c0, %c0_0] : memref<16x32xbf16, #tpu.memory_space<vmem>>, vector<16x32xbf16>
    %c0_1 = arith.constant 0 : index
    %c0_2 = arith.constant 0 : index
    %1 = vector.load %arg16[%c0_1, %c0_2] : memref<16x64xbf16, #tpu.memory_space<vmem>>, vector<16x32xbf16>
    tpu.vector_store %arg16[%c0_1, %c0_2], %0 {strides = array<i32>} : memref<16x64xbf16, #tpu.memory_space<vmem>>, vector<16x32xbf16>,
    %c0_3 = arith.constant 0 : index
    %c0_4 = arith.constant 0 : index
    %2 = vector.load %arg2[%c0_3, %c0_4] : memref<16x32xbf16, #tpu.memory_space<vmem>>, vector<16x32xbf16>
    %c0_5 = arith.constant 0 : index
    %c32 = arith.constant 32 : index
    %3 = vector.load %arg16[%c0_5, %c32] : memref<16x64xbf16, #tpu.memory_space<vmem>>, vector<16x32xbf16>
    tpu.vector_store %arg16[%c0_5, %c32], %2 {strides = array<i32>} : memref<16x64xbf16, #tpu.memory_space<vmem>>, vector<16x32xbf16>,
    %c0_6 = arith.constant 0 : index
    %c0_7 = arith.constant 0 : index
    %4 = vector.load %arg16[%c0_6, %c0_7] : memref<16x64xbf16, #tpu.memory_space<vmem>>, vector<16x64xbf16>
    %c0_8 = arith.constant 0 : index
    %c0_9 = arith.constant 0 : index
    %5 = vector.load %arg3[%c0_8, %c0_9] : memref<64x128xbf16, #tpu.memory_space<vmem>>, vector<64x128xbf16>
    %cst = arith.constant dense<0.000000e+00> : vector<16x128xf32>
    %6 = tpu.matmul %4, %5, %cst {dimension_numbers = #tpu.dot_dimension_numbers<[1], [0], [0], [1], [0, 0, 1, 1], [], []>} : vector<16x64xbf16>, vector<64x128xbf16>, vector<16x128xf32> -> vector<16x128xf32>
    %c0_10 = arith.constant 0 : index
    %c0_11 = arith.constant 0 : index
    %7 = vector.load %arg4[%c0_10, %c0_11] : memref<1x128xf32, #tpu.memory_space<vmem>>, vector<1x128xf32>
    %8 = vector.broadcast %7 : vector<1x128xf32> to vector<16x128xf32>
    %9 = arith.addf %6, %8 : vector<16x128xf32>
    %cst_12 = arith.constant 0.000000e+00 : f32
    %10 = vector.broadcast %cst_12 : f32 to vector<16x128xf32>
    %11 = arith.maximumf %9, %10 : vector<16x128xf32>
    %12 = arith.truncf %11 : vector<16x128xf32> to vector<16x128xbf16>
    %c0_13 = arith.constant 0 : index
    %c0_14 = arith.constant 0 : index
    %13 = vector.load %arg5[%c0_13, %c0_14] : memref<128x256xbf16, #tpu.memory_space<vmem>>, vector<128x256xbf16>
    %cst_15 = arith.constant dense<0.000000e+00> : vector<16x256xf32>
    %14 = tpu.matmul %12, %13, %cst_15 {dimension_numbers = #tpu.dot_dimension_numbers<[1], [0], [0], [1], [0, 0, 1, 1], [], []>} : vector<16x128xbf16>, vector<128x256xbf16>, vector<16x256xf32> -> vector<16x256xf32>
    %c0_16 = arith.constant 0 : index
    %c0_17 = arith.constant 0 : index
    %15 = vector.load %arg6[%c0_16, %c0_17] : memref<1x256xf32, #tpu.memory_space<vmem>>, vector<1x256xf32>
    %16 = vector.broadcast %15 : vector<1x256xf32> to vector<16x256xf32>
    %17 = arith.addf %14, %16 : vector<16x256xf32>
    %cst_18 = arith.constant 0.000000e+00 : f32
    %18 = vector.broadcast %cst_18 : f32 to vector<16x256xf32>
    %19 = arith.maximumf %17, %18 : vector<16x256xf32>
    %20 = arith.truncf %19 : vector<16x256xf32> to vector<16x256xbf16>
    %c0_19 = arith.constant 0 : index
    %c0_20 = arith.constant 0 : index
    %21 = vector.load %arg7[%c0_19, %c0_20] : memref<256x128xbf16, #tpu.memory_space<vmem>>, vector<256x128xbf16>
    %cst_21 = arith.constant dense<0.000000e+00> : vector<16x128xf32>
    %22 = tpu.matmul %20, %21, %cst_21 {dimension_numbers = #tpu.dot_dimension_numbers<[1], [0], [0], [1], [0, 0, 1, 1], [], []>} : vector<16x256xbf16>, vector<256x128xbf16>, vector<16x128xf32> -> vector<16x128xf32>
    %c0_22 = arith.constant 0 : index
    %c0_23 = arith.constant 0 : index
    %23 = vector.load %arg8[%c0_22, %c0_23] : memref<1x128xf32, #tpu.memory_space<vmem>>, vector<1x128xf32>
    %24 = vector.broadcast %23 : vector<1x128xf32> to vector<16x128xf32>
    %25 = arith.addf %22, %24 : vector<16x128xf32>
    %cst_24 = arith.constant 0.000000e+00 : f32
    %26 = vector.broadcast %cst_24 : f32 to vector<16x128xf32>
    %27 = arith.maximumf %25, %26 : vector<16x128xf32>
    %28 = arith.truncf %27 : vector<16x128xf32> to vector<16x128xbf16>
    %c0_25 = arith.constant 0 : index
    %c0_26 = arith.constant 0 : index
    %29 = vector.load %arg9[%c0_25, %c0_26] : memref<128x128xbf16, #tpu.memory_space<vmem>>, vector<128x128xbf16>
    %cst_27 = arith.constant dense<0.000000e+00> : vector<16x128xf32>
    %30 = tpu.matmul %28, %29, %cst_27 {dimension_numbers = #tpu.dot_dimension_numbers<[1], [0], [0], [1], [0, 0, 1, 1], [], []>} : vector<16x128xbf16>, vector<128x128xbf16>, vector<16x128xf32> -> vector<16x128xf32>
    %c0_28 = arith.constant 0 : index
    %c0_29 = arith.constant 0 : index
    %31 = vector.load %arg10[%c0_28, %c0_29] : memref<1x128xf32, #tpu.memory_space<vmem>>, vector<1x128xf32>
    %32 = vector.broadcast %31 : vector<1x128xf32> to vector<16x128xf32>
    %33 = arith.addf %30, %32 : vector<16x128xf32>
    %cst_30 = arith.constant 0.000000e+00 : f32
    %34 = vector.broadcast %cst_30 : f32 to vector<16x128xf32>
    %35 = arith.maximumf %33, %34 : vector<16x128xf32>
    %36 = arith.truncf %35 : vector<16x128xf32> to vector<16x128xbf16>
    %c0_31 = arith.constant 0 : index
    %c0_32 = arith.constant 0 : index
    %37 = vector.load %arg11[%c0_31, %c0_32] : memref<128x128xbf16, #tpu.memory_space<vmem>>, vector<128x128xbf16>
    %cst_33 = arith.constant dense<0.000000e+00> : vector<16x128xf32>
    %38 = tpu.matmul %36, %37, %cst_33 {dimension_numbers = #tpu.dot_dimension_numbers<[1], [0], [0], [1], [0, 0, 1, 1], [], []>} : vector<16x128xbf16>, vector<128x128xbf16>, vector<16x128xf32> -> vector<16x128xf32>
    %c0_34 = arith.constant 0 : index
    %c0_35 = arith.constant 0 : index
    %39 = vector.load %arg12[%c0_34, %c0_35] : memref<1x128xf32, #tpu.memory_space<vmem>>, vector<1x128xf32>
    %40 = vector.broadcast %39 : vector<1x128xf32> to vector<16x128xf32>
    %41 = arith.addf %38, %40 : vector<16x128xf32>
    %cst_36 = arith.constant 0.000000e+00 : f32
    %42 = vector.broadcast %cst_36 : f32 to vector<16x128xf32>
    %43 = arith.maximumf %41, %42 : vector<16x128xf32>
    %44 = arith.truncf %43 : vector<16x128xf32> to vector<16x128xbf16>
    %c0_37 = arith.constant 0 : index
    %c0_38 = arith.constant 0 : index
    %45 = vector.load %arg13[%c0_37, %c0_38] : memref<128x8xbf16, #tpu.memory_space<vmem>>, vector<128x8xbf16>
    %cst_39 = arith.constant dense<0.000000e+00> : vector<16x8xf32>
    %46 = tpu.matmul %44, %45, %cst_39 {dimension_numbers = #tpu.dot_dimension_numbers<[1], [0], [0], [1], [0, 0, 1, 1], [], []>} : vector<16x128xbf16>, vector<128x8xbf16>, vector<16x8xf32> -> vector<16x8xf32>
    %c0_40 = arith.constant 0 : index
    %c0_41 = arith.constant 0 : index
    %47 = vector.load %arg14[%c0_40, %c0_41] : memref<1x8xf32, #tpu.memory_space<vmem>>, vector<1x8xf32>
    %48 = vector.broadcast %47 : vector<1x8xf32> to vector<16x8xf32>
    %49 = arith.addf %46, %48 : vector<16x8xf32>
    %c0_42 = arith.constant 0 : index
    %c0_43 = arith.constant 0 : index
    %50 = vector.load %arg15[%c0_42, %c0_43] : memref<16x8xf32, #tpu.memory_space<vmem>>, vector<16x8xf32>
    tpu.vector_store %arg15[%c0_42, %c0_43], %49 {strides = array<i32>} : memref<16x8xf32, #tpu.memory_space<vmem>>, vector<16x8xf32>,
    return
  }
  func.func @transform_0(%arg0: i32) -> (i32, i32) {
    %c0_i32 = arith.constant 0 : i32
    %c0_i32_0 = arith.constant 0 : i32
    return %arg0, %c0_i32 : i32, i32
  }
  func.func @transform_1(%arg0: i32) -> (i32, i32) {
    %c0_i32 = arith.constant 0 : i32
    %c0_i32_0 = arith.constant 0 : i32
    return %arg0, %c0_i32 : i32, i32
  }
  func.func @transform_2(%arg0: i32) -> (i32, i32) {
    %c0_i32 = arith.constant 0 : i32
    %c0_i32_0 = arith.constant 0 : i32
    %c0_i32_1 = arith.constant 0 : i32
    return %c0_i32, %c0_i32_0 : i32, i32
  }
  func.func @transform_3(%arg0: i32) -> (i32, i32) {
    %c0_i32 = arith.constant 0 : i32
    %c0_i32_0 = arith.constant 0 : i32
    %c0_i32_1 = arith.constant 0 : i32
    return %c0_i32, %c0_i32_0 : i32, i32
  }
  func.func @transform_4(%arg0: i32) -> (i32, i32) {
    %c0_i32 = arith.constant 0 : i32
    %c0_i32_0 = arith.constant 0 : i32
    %c0_i32_1 = arith.constant 0 : i32
    return %c0_i32, %c0_i32_0 : i32, i32
  }
  func.func @transform_5(%arg0: i32) -> (i32, i32) {
    %c0_i32 = arith.constant 0 : i32
    %c0_i32_0 = arith.constant 0 : i32
    %c0_i32_1 = arith.constant 0 : i32
    return %c0_i32, %c0_i32_0 : i32, i32
  }
  func.func @transform_6(%arg0: i32) -> (i32, i32) {
    %c0_i32 = arith.constant 0 : i32
    %c0_i32_0 = arith.constant 0 : i32
    %c0_i32_1 = arith.constant 0 : i32
    return %c0_i32, %c0_i32_0 : i32, i32
  }
  func.func @transform_7(%arg0: i32) -> (i32, i32) {
    %c0_i32 = arith.constant 0 : i32
    %c0_i32_0 = arith.constant 0 : i32
    %c0_i32_1 = arith.constant 0 : i32
    return %c0_i32, %c0_i32_0 : i32, i32
  }
  func.func @transform_8(%arg0: i32) -> (i32, i32) {
    %c0_i32 = arith.constant 0 : i32
    %c0_i32_0 = arith.constant 0 : i32
    %c0_i32_1 = arith.constant 0 : i32
    return %c0_i32, %c0_i32_0 : i32, i32
  }
  func.func @transform_9(%arg0: i32) -> (i32, i32) {
    %c0_i32 = arith.constant 0 : i32
    %c0_i32_0 = arith.constant 0 : i32
    %c0_i32_1 = arith.constant 0 : i32
    return %c0_i32, %c0_i32_0 : i32, i32
  }
  func.func @transform_10(%arg0: i32) -> (i32, i32) {
    %c0_i32 = arith.constant 0 : i32
    %c0_i32_0 = arith.constant 0 : i32
    %c0_i32_1 = arith.constant 0 : i32
    return %c0_i32, %c0_i32_0 : i32, i32
  }
  func.func @transform_11(%arg0: i32) -> (i32, i32) {
    %c0_i32 = arith.constant 0 : i32
    %c0_i32_0 = arith.constant 0 : i32
    %c0_i32_1 = arith.constant 0 : i32
    return %c0_i32, %c0_i32_0 : i32, i32
  }
  func.func @transform_12(%arg0: i32) -> (i32, i32) {
    %c0_i32 = arith.constant 0 : i32
    %c0_i32_0 = arith.constant 0 : i32
    %c0_i32_1 = arith.constant 0 : i32
    return %c0_i32, %c0_i32_0 : i32, i32
  }
  func.func @transform_13(%arg0: i32) -> (i32, i32) {
    %c0_i32 = arith.constant 0 : i32
    %c0_i32_0 = arith.constant 0 : i32
    %c0_i32_1 = arith.constant 0 : i32
    return %c0_i32, %c0_i32_0 : i32, i32
  }
  func.func @transform_14(%arg0: i32) -> (i32, i32) {
    %c0_i32 = arith.constant 0 : i32
    %c0_i32_0 = arith.constant 0 : i32
    return %arg0, %c0_i32 : i32, i32
  }
}

</mosaic_0001>

<llo_original>
// kernel: tpu_custom_call.1
$region0: #{tpu_custom_call.1}
  #allocation0 [shape = 'u32[]', space=smem, size = 0x4, offset = 0x4, fixed_abs, tag = 'smem constant byte address 0x4 - core index']
  #allocation1 [shape = 'u32[144,128]{1,0:T(1,128)}', space=vmem, size = 0x12000, scoped, tag = 'internal scratch']
  #allocation2 [shape = 'bf16[16,64]{1,0:T(8,128)(2,1)}', space=vmem, size = 0x1000, scoped, tag = 'scratch operand']
  %s0 = inlined_call_operand.vmem [shape: bf16[16,32], index: 0, kind: input, shape index: {}]
  %s1 = inlined_call_operand.vmem [shape: bf16[16,32], index: 1, kind: input, shape index: {}]
  %s2 = inlined_call_operand.hbm [shape: bf16[64,128], index: 2, kind: input, shape index: {}]
  %s3 = inlined_call_operand.hbm [shape: f32[1,128], index: 3, kind: input, shape index: {}]
  %s4 = inlined_call_operand.hbm [shape: bf16[128,256], index: 4, kind: input, shape index: {}]
  %s5 = inlined_call_operand.hbm [shape: f32[1,256], index: 5, kind: input, shape index: {}]
  %s6 = inlined_call_operand.hbm [shape: bf16[256,128], index: 6, kind: input, shape index: {}]
  %s7 = inlined_call_operand.hbm [shape: f32[1,128], index: 7, kind: input, shape index: {}]
  %s8 = inlined_call_operand.vmem [shape: bf16[128,128], index: 8, kind: input, shape index: {}]
  %s9 = inlined_call_operand.hbm [shape: f32[1,128], index: 9, kind: input, shape index: {}]
  %s10 = inlined_call_operand.hbm [shape: bf16[128,128], index: 10, kind: input, shape index: {}]
  %s11 = inlined_call_operand.vmem [shape: f32[1,128], index: 11, kind: input, shape index: {}]
  %s12 = inlined_call_operand.vmem [shape: bf16[128,8], index: 12, kind: input, shape index: {}]
  %s13 = inlined_call_operand.vmem [shape: f32[1,8], index: 13, kind: input, shape index: {}]
  %s14 = inlined_call_operand.vmem [shape: f32[16,8], index: 14, kind: output, shape index: {}]
  %s15 = sld [smem:[#allocation0]]
  $region98: #{tpu_custom_call.1} parent=0
    _
  %s17 = ssub.s32 1, %s15
  %s18 = scalar_select 0, %s17, %s15
  $region1: #{tpu_custom_call.1} parent=0
    #allocation3 [shape = 'u8[16384]{0}', space=vmem, size = 0x4000, scoped, tag = 'input window, operand 2, single buffered']
    #allocation4 [shape = 's32[1]{0}', space=sflag, size = 0x4, scoped, tag = 'scoped memory for tpu_custom_call.1']
    #allocation5 [shape = 'u8[512]{0}', space=vmem, size = 0x400, scoped, tag = 'input window, operand 3, single buffered']
    #allocation6 [shape = 's32[1]{0}', space=sflag, size = 0x4, scoped, tag = 'scoped memory for tpu_custom_call.1']
    #allocation7 [shape = 'u8[65536]{0}', space=vmem, size = 0x10000, scoped, tag = 'input window, operand 4, single buffered']
    #allocation8 [shape = 'u8[1024]{0}', space=vmem, size = 0x400, scoped, tag = 'input window, operand 5, single buffered']
    #allocation9 [shape = 's32[1]{0}', space=sflag, size = 0x4, scoped, tag = 'scoped memory for tpu_custom_call.1']
    #allocation10 [shape = 'u8[65536]{0}', space=vmem, size = 0x10000, scoped, tag = 'input window, operand 6, single buffered']
    #allocation11 [shape = 'u8[512]{0}', space=vmem, size = 0x400, scoped, tag = 'input window, operand 7, single buffered']
    #allocation12 [shape = 's32[1]{0}', space=sflag, size = 0x4, scoped, tag = 'scoped memory for tpu_custom_call.1']
    #allocation13 [shape = 'u8[512]{0}', space=vmem, size = 0x400, scoped, tag = 'input window, operand 9, single buffered']
    #allocation14 [shape = 'u8[32768]{0}', space=vmem, size = 0x8000, scoped, tag = 'input window, operand 10, single buffered']
    #allocation15 [shape = 's32[1]{0}', space=sflag, size = 0x4, scoped, tag = 'scoped memory for tpu_custom_call.1']
    %19 = vsyncpa [#allocation4], 0
    %20 = vsyncpa [#allocation6], 0
    %21 = vsyncpa [#allocation9], 0
    %22 = vsyncpa [#allocation12], 0
    %23 = vsyncpa [#allocation15], 0
    // Predicated region
    $region2: #{tpu_custom_call.1} parent=1 // pred_check
      _
    $region3: #{tpu_custom_call.1} parent=1 // pred_check_branch
      %25 = sbr.rel (0) target = $region5
    $region4: #{tpu_custom_call.1} parent=1 // pred_region
      _
    $region5: #{tpu_custom_call.1} parent=1 // pred_fallthru
      _
    // Predicated region
    $region6: #{tpu_custom_call.1} parent=1 // pred_check
      _
    $region7: #{tpu_custom_call.1} parent=1 // pred_check_branch
      %27 = sbr.rel (0) target = $region9
    $region8: #{tpu_custom_call.1} parent=1 // pred_region
      _
    $region9: #{tpu_custom_call.1} parent=1 // pred_fallthru
      _
    // Predicated region
    $region10: #{tpu_custom_call.1} parent=1 // pred_check
      _
    $region11: #{tpu_custom_call.1} parent=1 // pred_check_branch
      %29 = sbr.rel (0) target = $region13
    $region12: #{tpu_custom_call.1} parent=1 // pred_region
      %s31 = ssub.s32 512, 512
      %32 = vsyncadd [#allocation4], %s31
      %s33 = sshll.u32 [#allocation3], 4
      %s34 = int_to_ptr.vmem [resolvable:$true] %s33
      %39 = dma.hbm_to_vmem [thread:$0]  %s2, 512, %s34, [#allocation4], 64, 64, 4
    $region13: #{tpu_custom_call.1} parent=1 // pred_fallthru
      _
    // Predicated region
    $region14: #{tpu_custom_call.1} parent=1 // pred_check
      _
    $region15: #{tpu_custom_call.1} parent=1 // pred_check_branch
      %41 = sbr.rel (0) target = $region17
    $region16: #{tpu_custom_call.1} parent=1 // pred_region
      %s43 = ssub.s32 16, 16
      %44 = vsyncadd [#allocation6], %s43
      %s46 = sshll.u32 [#allocation5], 4
      %s47 = int_to_ptr.vmem [resolvable:$true] %s46
      %49 = dma.hbm_to_vmem [thread:$0]  %s3, 16, %s47, [#allocation6]
    $region17: #{tpu_custom_call.1} parent=1 // pred_fallthru
      _
    // Predicated region
    $region18: #{tpu_custom_call.1} parent=1 // pred_check
      _
    $region19: #{tpu_custom_call.1} parent=1 // pred_check_branch
      %51 = sbr.rel (0) target = $region21
    $region20: #{tpu_custom_call.1} parent=1 // pred_region
      %s53 = ssub.s32 2048, 2048
      %54 = vsyncadd [#allocation6], %s53
      %s55 = sshll.u32 [#allocation7], 4
      %s56 = int_to_ptr.vmem [resolvable:$true] %s55
      %61 = dma.hbm_to_vmem [thread:$0]  %s4, 2048, %s56, [#allocation6], 128, 128, 8
    $region21: #{tpu_custom_call.1} parent=1 // pred_fallthru
      _
    // Predicated region
    $region22: #{tpu_custom_call.1} parent=1 // pred_check
      _
    $region23: #{tpu_custom_call.1} parent=1 // pred_check_branch
      %63 = sbr.rel (0) target = $region25
    $region24: #{tpu_custom_call.1} parent=1 // pred_region
      %s65 = ssub.s32 32, 32
      %66 = vsyncadd [#allocation9], %s65
      %s68 = sshll.u32 [#allocation8], 4
      %s69 = int_to_ptr.vmem [resolvable:$true] %s68
      %71 = dma.hbm_to_vmem [thread:$0]  %s5, 32, %s69, [#allocation9]
    $region25: #{tpu_custom_call.1} parent=1 // pred_fallthru
      _
    // Predicated region
    $region26: #{tpu_custom_call.1} parent=1 // pred_check
      _
    $region27: #{tpu_custom_call.1} parent=1 // pred_check_branch
      %73 = sbr.rel (0) target = $region29
    $region28: #{tpu_custom_call.1} parent=1 // pred_region
      %s75 = ssub.s32 2048, 2048
      %76 = vsyncadd [#allocation9], %s75
      %s77 = sshll.u32 [#allocation10], 4
      %s78 = int_to_ptr.vmem [resolvable:$true] %s77
      %83 = dma.hbm_to_vmem [thread:$0]  %s6, 2048, %s78, [#allocation9], 64, 64, 4
    $region29: #{tpu_custom_call.1} parent=1 // pred_fallthru
      _
    // Predicated region
    $region30: #{tpu_custom_call.1} parent=1 // pred_check
      _
    $region31: #{tpu_custom_call.1} parent=1 // pred_check_branch
      %85 = sbr.rel (0) target = $region33
    $region32: #{tpu_custom_call.1} parent=1 // pred_region
      %s87 = ssub.s32 16, 16
      %88 = vsyncadd [#allocation12], %s87
      %s90 = sshll.u32 [#allocation11], 4
      %s91 = int_to_ptr.vmem [resolvable:$true] %s90
      %93 = dma.hbm_to_vmem [thread:$0]  %s7, 16, %s91, [#allocation12]
    $region33: #{tpu_custom_call.1} parent=1 // pred_fallthru
      _
    // Predicated region
    $region34: #{tpu_custom_call.1} parent=1 // pred_check
      _
    $region35: #{tpu_custom_call.1} parent=1 // pred_check_branch
      %95 = sbr.rel (0) target = $region37
    $region36: #{tpu_custom_call.1} parent=1 // pred_region
      _
    $region37: #{tpu_custom_call.1} parent=1 // pred_fallthru
      _
    // Predicated region
    $region38: #{tpu_custom_call.1} parent=1 // pred_check
      _
    $region39: #{tpu_custom_call.1} parent=1 // pred_check_branch
      %97 = sbr.rel (0) target = $region41
    $region40: #{tpu_custom_call.1} parent=1 // pred_region
      %s99 = ssub.s32 16, 16
      %100 = vsyncadd [#allocation12], %s99
      %s102 = sshll.u32 [#allocation13], 4
      %s103 = int_to_ptr.vmem [resolvable:$true] %s102
      %105 = dma.hbm_to_vmem [thread:$0]  %s9, 16, %s103, [#allocation12]
    $region41: #{tpu_custom_call.1} parent=1 // pred_fallthru
      _
    // Predicated region
    $region42: #{tpu_custom_call.1} parent=1 // pred_check
      _
    $region43: #{tpu_custom_call.1} parent=1 // pred_check_branch
      %107 = sbr.rel (0) target = $region45
    $region44: #{tpu_custom_call.1} parent=1 // pred_region
      %s109 = ssub.s32 1024, 1024
      %110 = vsyncadd [#allocation15], %s109
      %s111 = sshll.u32 [#allocation14], 4
      %s112 = int_to_ptr.vmem [resolvable:$true] %s111
      %117 = dma.hbm_to_vmem [thread:$0]  %s10, 1024, %s112, [#allocation15], 64, 64, 4
    $region45: #{tpu_custom_call.1} parent=1 // pred_fallthru
      _
    // Predicated region
    $region46: #{tpu_custom_call.1} parent=1 // pred_check
      _
    $region47: #{tpu_custom_call.1} parent=1 // pred_check_branch
      %119 = sbr.rel (0) target = $region49
    $region48: #{tpu_custom_call.1} parent=1 // pred_region
      _
    $region49: #{tpu_custom_call.1} parent=1 // pred_fallthru
      _
    // Predicated region
    $region50: #{tpu_custom_call.1} parent=1 // pred_check
      _
    $region51: #{tpu_custom_call.1} parent=1 // pred_check_branch
      %121 = sbr.rel (0) target = $region53
    $region52: #{tpu_custom_call.1} parent=1 // pred_region
      _
    $region53: #{tpu_custom_call.1} parent=1 // pred_fallthru
      _
    // Predicated region
    $region54: #{tpu_custom_call.1} parent=1 // pred_check
      _
    $region55: #{tpu_custom_call.1} parent=1 // pred_check_branch
      %123 = sbr.rel (0) target = $region57
    $region56: #{tpu_custom_call.1} parent=1 // pred_region
      _
    $region57: #{tpu_custom_call.1} parent=1 // pred_fallthru
      _
    // Predicated region
    $region58: #{tpu_custom_call.1} parent=1 // pred_check
      _
    $region59: #{tpu_custom_call.1} parent=1 // pred_check_branch
      %125 = sbr.rel (0) target = $region61
    $region60: #{tpu_custom_call.1} parent=1 // pred_region
      %126 = dma.done [#allocation4], 512
    $region61: #{tpu_custom_call.1} parent=1 // pred_fallthru
      _
    // Predicated region
    $region62: #{tpu_custom_call.1} parent=1 // pred_check
      _
    $region63: #{tpu_custom_call.1} parent=1 // pred_check_branch
      %128 = sbr.rel (0) target = $region65
    $region64: #{tpu_custom_call.1} parent=1 // pred_region
      %129 = dma.done [#allocation6], 16
    $region65: #{tpu_custom_call.1} parent=1 // pred_fallthru
      _
    // Predicated region
    $region66: #{tpu_custom_call.1} parent=1 // pred_check
      _
    $region67: #{tpu_custom_call.1} parent=1 // pred_check_branch
      %131 = sbr.rel (0) target = $region69
    $region68: #{tpu_custom_call.1} parent=1 // pred_region
      %132 = dma.done [#allocation6], 2048
    $region69: #{tpu_custom_call.1} parent=1 // pred_fallthru
      _
    // Predicated region
    $region70: #{tpu_custom_call.1} parent=1 // pred_check
      _
    $region71: #{tpu_custom_call.1} parent=1 // pred_check_branch
      %134 = sbr.rel (0) target = $region73
    $region72: #{tpu_custom_call.1} parent=1 // pred_region
      %135 = dma.done [#allocation9], 32
    $region73: #{tpu_custom_call.1} parent=1 // pred_fallthru
      _
    // Predicated region
    $region74: #{tpu_custom_call.1} parent=1 // pred_check
      _
    $region75: #{tpu_custom_call.1} parent=1 // pred_check_branch
      %137 = sbr.rel (0) target = $region77
    $region76: #{tpu_custom_call.1} parent=1 // pred_region
      %138 = dma.done [#allocation9], 2048
    $region77: #{tpu_custom_call.1} parent=1 // pred_fallthru
      _
    // Predicated region
    $region78: #{tpu_custom_call.1} parent=1 // pred_check
      _
    $region79: #{tpu_custom_call.1} parent=1 // pred_check_branch
      %140 = sbr.rel (0) target = $region81
    $region80: #{tpu_custom_call.1} parent=1 // pred_region
      %141 = dma.done [#allocation12], 16
    $region81: #{tpu_custom_call.1} parent=1 // pred_fallthru
      _
    // Predicated region
    $region82: #{tpu_custom_call.1} parent=1 // pred_check
      _
    $region83: #{tpu_custom_call.1} parent=1 // pred_check_branch
      %143 = sbr.rel (0) target = $region85
    $region84: #{tpu_custom_call.1} parent=1 // pred_region
      %144 = dma.done [#allocation12], 16
    $region85: #{tpu_custom_call.1} parent=1 // pred_fallthru
      _
    // Predicated region
    $region86: #{tpu_custom_call.1} parent=1 // pred_check
      _
    $region87: #{tpu_custom_call.1} parent=1 // pred_check_branch
      %146 = sbr.rel (0) target = $region89
    $region88: #{tpu_custom_call.1} parent=1 // pred_region
      %147 = dma.done [#allocation15], 1024
    $region89: #{tpu_custom_call.1} parent=1 // pred_fallthru
      _
    %v149 = vld [vmem:[%s0] sm:$0xf]
    %v150 = vld [vmem:[%s0 + $0x4] sm:$0xf]
    %vm151 = vcmask 257024
    %152 = vst.msk [vmem:[#allocation2] sm:$0xf] %vm151, %v149
    %153 = vst.msk [vmem:[#allocation2 + $0x4] sm:$0xf] %vm151, %v150
    %v154 = vld [vmem:[%s1] sm:$0xf]
    %v155 = vld [vmem:[%s1 + $0x4] sm:$0xf]
    %158 = vrot.lane.b32.xlu0 %v154, 32
    %v159 = vpop.permute.xlu0 %158
    %160 = vrot.lane.b32.xlu0 %v155, 32
    %v161 = vpop.permute.xlu0 %160
    %vm164 = vcmask 519424
    %165 = vst.msk [vmem:[#allocation2] sm:$0xf] %vm164, %v159
    %166 = vst.msk [vmem:[#allocation2 + $0x4] sm:$0xf] %vm164, %v161
    %v167 = vld [vmem:[#allocation2] sm:$0xf]
    %v168 = vld [vmem:[#allocation2 + $0x4] sm:$0xf]
    %v169 = vld [vmem:[#allocation3] sm:$0xf]
    %v170 = vld [vmem:[#allocation3 + $0x4] sm:$0xf]
    %v171 = vld [vmem:[#allocation3 + $0x8] sm:$0xf]
    %v172 = vld [vmem:[#allocation3 + $0xc] sm:$0xf]
    %v173 = vld [vmem:[#allocation3 + $0x10] sm:$0xf]
    %v174 = vld [vmem:[#allocation3 + $0x14] sm:$0xf]
    %v175 = vld [vmem:[#allocation3 + $0x18] sm:$0xf]
    %v176 = vld [vmem:[#allocation3 + $0x1c] sm:$0xf]
    %v177 = vld [vmem:[#allocation5] sm:$0x1]
    %v179 = vlaneseq
    %v180 = vshrl.u32 %v179, 7
    %v181 = vsub.s32 0, %v180
    %v182 = vrot.slane %v177, %v181
    %v186 = vunpack.c.l.b16 %v167
    %v187 = vunpack.c.l.b16 %v168
    %v188 = vpack.c.b16 %v187, %v186
    %v197 = vunpack.c.l.b16 %v169
    %v198 = vunpack.c.l.b16 %v170
    %v199 = vunpack.c.l.b16 %v171
    %v200 = vunpack.c.l.b16 %v172
    %v201 = vunpack.c.l.b16 %v173
    %v202 = vunpack.c.l.b16 %v174
    %v203 = vunpack.c.l.b16 %v175
    %v204 = vunpack.c.l.b16 %v176
    %v205 = vpack.c.b16 %v198, %v197
    %v206 = vpack.c.b16 %v200, %v199
    %v207 = vpack.c.b16 %v202, %v201
    %v208 = vpack.c.b16 %v204, %v203
    %vm213 = vcmask 523264
    %v215 = vsel %vm213, %v188, 0
    %217 = vmatprep.subr.bf16.mxu0 0
    %218 = vmatpush1.bf16.msra.mxu0 0
    %219 = vmatprep.subr.bf16.mxu0 0
    %220 = vmatpush1.bf16.msra.mxu0 0
    %221 = vmatprep.subr.bf16.mxu0 0
    %222 = vmatpush1.bf16.msra.mxu0 0
    %223 = vmatprep.subr.bf16.mxu0 0
    %224 = vmatpush1.bf16.msra.mxu0 0
    %225 = vmatprep.subr.bf16.mxu0 0
    %226 = vmatpush1.bf16.msra.mxu0 %v208
    %227 = vmatprep.subr.bf16.mxu0 0
    %228 = vmatpush1.bf16.msra.mxu0 %v207
    %229 = vmatprep.subr.bf16.mxu0 0
    %230 = vmatpush1.bf16.msra.mxu0 %v206
    %231 = vmatprep.subr.bf16.mxu0 0
    %232 = vmatpush1.bf16.msra.mxu0 %v205
    %233 = vmatprep.subr.bf16.mxu0 0
    %234 = vmatpush2.bf16.msra.mxu0 0
    %235 = vmatprep.subr.bf16.mxu0 0
    %236 = vmatpush2.bf16.msra.mxu0 0
    %237 = vmatprep.subr.bf16.mxu0 0
    %238 = vmatpush2.bf16.msra.mxu0 0
    %239 = vmatprep.subr.bf16.mxu0 0
    %240 = vmatpush2.bf16.msra.mxu0 0
    %241 = vmatprep.subr.bf16.mxu0 0
    %242 = vmatpush2.bf16.msra.mxu0 0
    %243 = vmatprep.subr.bf16.mxu0 0
    %244 = vmatpush2.bf16.msra.mxu0 0
    %245 = vmatprep.subr.bf16.mxu0 0
    %246 = vmatpush2.bf16.msra.mxu0 0
    %247 = vmatprep.subr.bf16.mxu0 0
    %248 = vmatpush2.bf16.msra.mxu0 0
    %249 = vmatprep.mubr.bf16.mxu0 0
    %250 = vmatmul.mubr.bf16.gmra.mxu0 %v215
    %v251 = vpop.f32.mrf.mxu0
    %v252 = vadd.f32 %v182, %v251
    %v253 = vpop.f32.mrf.mxu0
    %v254 = vpop.f32.mrf.mxu0
    %v255 = vadd.f32 %v182, %v254
    %v256 = vpop.f32.mrf.mxu0
    %257 = vdwg.mxu0
    %v258 = vmax.f32 %v252, 0.0
    %v259 = vmax.f32 %v255, 0.0
    %v260 = vpack.c.bf16 %v259, %v258
    %v261 = vld [vmem:[#allocation7] sm:$0xff]
    %v262 = vld [vmem:[#allocation7 + $0x8] sm:$0xff]
    %v263 = vld [vmem:[#allocation7 + $0x10] sm:$0xff]
    %v264 = vld [vmem:[#allocation7 + $0x18] sm:$0xff]
    %v265 = vld [vmem:[#allocation7 + $0x20] sm:$0xff]
    %v266 = vld [vmem:[#allocation7 + $0x28] sm:$0xff]
    %v267 = vld [vmem:[#allocation7 + $0x30] sm:$0xff]
    %v268 = vld [vmem:[#allocation7 + $0x38] sm:$0xff]
    %v269 = vld [vmem:[#allocation7 + $0x40] sm:$0xff]
    %v270 = vld [vmem:[#allocation7 + $0x48] sm:$0xff]
    %v271 = vld [vmem:[#allocation7 + $0x50] sm:$0xff]
    %v272 = vld [vmem:[#allocation7 + $0x58] sm:$0xff]
    %v273 = vld [vmem:[#allocation7 + $0x60] sm:$0xff]
    %v274 = vld [vmem:[#allocation7 + $0x68] sm:$0xff]
    %v275 = vld [vmem:[#allocation7 + $0x70] sm:$0xff]
    %v276 = vld [vmem:[#allocation7 + $0x78] sm:$0xff]
    %v277 = vld [vmem:[#allocation8] sm:$0x3]
    %v279 = vlaneseq
    %v280 = vshrl.u32 %v279, 7
    %v281 = vsub.s32 0, %v280
    %v282 = vrot.slane %v277, %v281
    %v283 = vlaneseq
    %v284 = vshrl.u32 %v283, 7
    %v285 = vsub.s32 1, %v284
    %v286 = vrot.slane %v277, %v285
    %v305 = vunpack.c.l.b16 %v261
    %v306 = vunpack.c.h.b16 %v261
    %v307 = vunpack.c.l.b16 %v262
    %v308 = vunpack.c.h.b16 %v262
    %v309 = vunpack.c.l.b16 %v263
    %v310 = vunpack.c.h.b16 %v263
    %v311 = vunpack.c.l.b16 %v264
    %v312 = vunpack.c.h.b16 %v264
    %v313 = vunpack.c.l.b16 %v265
    %v314 = vunpack.c.h.b16 %v265
    %v315 = vunpack.c.l.b16 %v266
    %v316 = vunpack.c.h.b16 %v266
    %v317 = vunpack.c.l.b16 %v267
    %v318 = vunpack.c.h.b16 %v267
    %v319 = vunpack.c.l.b16 %v268
    %v320 = vunpack.c.h.b16 %v268
    %v321 = vunpack.c.l.b16 %v269
    %v322 = vunpack.c.h.b16 %v269
    %v323 = vunpack.c.l.b16 %v270
    %v324 = vunpack.c.h.b16 %v270
    %v325 = vunpack.c.l.b16 %v271
    %v326 = vunpack.c.h.b16 %v271
    %v327 = vunpack.c.l.b16 %v272
    %v328 = vunpack.c.h.b16 %v272
    %v329 = vunpack.c.l.b16 %v273
    %v330 = vunpack.c.h.b16 %v273
    %v331 = vunpack.c.l.b16 %v274
    %v332 = vunpack.c.h.b16 %v274
    %v333 = vunpack.c.l.b16 %v275
    %v334 = vunpack.c.h.b16 %v275
    %v335 = vunpack.c.l.b16 %v276
    %v336 = vunpack.c.h.b16 %v276
    %v337 = vpack.c.b16 %v307, %v305
    %v338 = vpack.c.b16 %v308, %v306
    %v339 = vpack.c.b16 %v311, %v309
    %v340 = vpack.c.b16 %v312, %v310
    %v341 = vpack.c.b16 %v315, %v313
    %v342 = vpack.c.b16 %v316, %v314
    %v343 = vpack.c.b16 %v319, %v317
    %v344 = vpack.c.b16 %v320, %v318
    %v345 = vpack.c.b16 %v323, %v321
    %v346 = vpack.c.b16 %v324, %v322
    %v347 = vpack.c.b16 %v327, %v325
    %v348 = vpack.c.b16 %v328, %v326
    %v349 = vpack.c.b16 %v331, %v329
    %v350 = vpack.c.b16 %v332, %v330
    %v351 = vpack.c.b16 %v335, %v333
    %v352 = vpack.c.b16 %v336, %v334
    %369 = vmatprep.subr.bf16.mxu0 %v352
    %370 = vmatpush1.bf16.msra.mxu0 %v351
    %371 = vmatprep.subr.bf16.mxu0 %v350
    %372 = vmatpush1.bf16.msra.mxu0 %v349
    %373 = vmatprep.subr.bf16.mxu0 %v348
    %374 = vmatpush1.bf16.msra.mxu0 %v347
    %375 = vmatprep.subr.bf16.mxu0 %v346
    %376 = vmatpush1.bf16.msra.mxu0 %v345
    %377 = vmatprep.subr.bf16.mxu0 %v344
    %378 = vmatpush1.bf16.msra.mxu0 %v343
    %379 = vmatprep.subr.bf16.mxu0 %v342
    %380 = vmatpush1.bf16.msra.mxu0 %v341
    %381 = vmatprep.subr.bf16.mxu0 %v340
    %382 = vmatpush1.bf16.msra.mxu0 %v339
    %383 = vmatprep.subr.bf16.mxu0 %v338
    %384 = vmatpush1.bf16.msra.mxu0 %v337
    %385 = vmatprep.subr.bf16.mxu0 0
    %386 = vmatpush2.bf16.msra.mxu0 0
    %387 = vmatprep.subr.bf16.mxu0 0
    %388 = vmatpush2.bf16.msra.mxu0 0
    %389 = vmatprep.subr.bf16.mxu0 0
    %390 = vmatpush2.bf16.msra.mxu0 0
    %391 = vmatprep.subr.bf16.mxu0 0
    %392 = vmatpush2.bf16.msra.mxu0 0
    %393 = vmatprep.subr.bf16.mxu0 0
    %394 = vmatpush2.bf16.msra.mxu0 0
    %395 = vmatprep.subr.bf16.mxu0 0
    %396 = vmatpush2.bf16.msra.mxu0 0
    %397 = vmatprep.subr.bf16.mxu0 0
    %398 = vmatpush2.bf16.msra.mxu0 0
    %399 = vmatprep.subr.bf16.mxu0 0
    %400 = vmatpush2.bf16.msra.mxu0 0
    %401 = vmatprep.mubr.bf16.mxu0 0
    %402 = vmatmul.mubr.bf16.gmra.mxu0 %v260
    %v403 = vpop.f32.mrf.mxu0
    %v404 = vadd.f32 %v282, %v403
    %v405 = vpop.f32.mrf.mxu0
    %v406 = vadd.f32 %v286, %v405
    %v407 = vpop.f32.mrf.mxu0
    %v408 = vadd.f32 %v282, %v407
    %v409 = vpop.f32.mrf.mxu0
    %v410 = vadd.f32 %v286, %v409
    %411 = vdwg.mxu0
    %v412 = vmax.f32 %v404, 0.0
    %v413 = vmax.f32 %v406, 0.0
    %v414 = vmax.f32 %v408, 0.0
    %v415 = vmax.f32 %v410, 0.0
    %v416 = vpack.c.bf16 %v414, %v412
    %v417 = vpack.c.bf16 %v415, %v413
    %v418 = vld [vmem:[#allocation10] sm:$0xf]
    %v419 = vld [vmem:[#allocation10 + $0x4] sm:$0xf]
    %v420 = vld [vmem:[#allocation10 + $0x8] sm:$0xf]
    %v421 = vld [vmem:[#allocation10 + $0xc] sm:$0xf]
    %v422 = vld [vmem:[#allocation10 + $0x10] sm:$0xf]
    %v423 = vld [vmem:[#allocation10 + $0x14] sm:$0xf]
    %v424 = vld [vmem:[#allocation10 + $0x18] sm:$0xf]
    %v425 = vld [vmem:[#allocation10 + $0x1c] sm:$0xf]
    %v426 = vld [vmem:[#allocation10 + $0x20] sm:$0xf]
    %v427 = vld [vmem:[#allocation10 + $0x24] sm:$0xf]
    %v428 = vld [vmem:[#allocation10 + $0x28] sm:$0xf]
    %v429 = vld [vmem:[#allocation10 + $0x2c] sm:$0xf]
    %v430 = vld [vmem:[#allocation10 + $0x30] sm:$0xf]
    %v431 = vld [vmem:[#allocation10 + $0x34] sm:$0xf]
    %v432 = vld [vmem:[#allocation10 + $0x38] sm:$0xf]
    %v433 = vld [vmem:[#allocation10 + $0x3c] sm:$0xf]
    %v434 = vld [vmem:[#allocation10 + $0x40] sm:$0xf]
    %v435 = vld [vmem:[#allocation10 + $0x44] sm:$0xf]
    %v436 = vld [vmem:[#allocation10 + $0x48] sm:$0xf]
    %v437 = vld [vmem:[#allocation10 + $0x4c] sm:$0xf]
    %v438 = vld [vmem:[#allocation10 + $0x50] sm:$0xf]
    %v439 = vld [vmem:[#allocation10 + $0x54] sm:$0xf]
    %v440 = vld [vmem:[#allocation10 + $0x58] sm:$0xf]
    %v441 = vld [vmem:[#allocation10 + $0x5c] sm:$0xf]
    %v442 = vld [vmem:[#allocation10 + $0x60] sm:$0xf]
    %v443 = vld [vmem:[#allocation10 + $0x64] sm:$0xf]
    %v444 = vld [vmem:[#allocation10 + $0x68] sm:$0xf]
    %v445 = vld [vmem:[#allocation10 + $0x6c] sm:$0xf]
    %v446 = vld [vmem:[#allocation10 + $0x70] sm:$0xf]
    %v447 = vld [vmem:[#allocation10 + $0x74] sm:$0xf]
    %v448 = vld [vmem:[#allocation10 + $0x78] sm:$0xf]
    %v449 = vld [vmem:[#allocation10 + $0x7c] sm:$0xf]
    %v450 = vld [vmem:[#allocation11] sm:$0x1]
    %v452 = vlaneseq
    %v453 = vshrl.u32 %v452, 7
    %v454 = vsub.s32 0, %v453
    %v455 = vrot.slane %v450, %v454
    %v489 = vunpack.c.l.b16 %v418
    %v490 = vunpack.c.l.b16 %v419
    %v491 = vunpack.c.l.b16 %v420
    %v492 = vunpack.c.l.b16 %v421
    %v493 = vunpack.c.l.b16 %v422
    %v494 = vunpack.c.l.b16 %v423
    %v495 = vunpack.c.l.b16 %v424
    %v496 = vunpack.c.l.b16 %v425
    %v497 = vunpack.c.l.b16 %v426
    %v498 = vunpack.c.l.b16 %v427
    %v499 = vunpack.c.l.b16 %v428
    %v500 = vunpack.c.l.b16 %v429
    %v501 = vunpack.c.l.b16 %v430
    %v502 = vunpack.c.l.b16 %v431
    %v503 = vunpack.c.l.b16 %v432
    %v504 = vunpack.c.l.b16 %v433
    %v505 = vunpack.c.l.b16 %v434
    %v506 = vunpack.c.l.b16 %v435
    %v507 = vunpack.c.l.b16 %v436
    %v508 = vunpack.c.l.b16 %v437
    %v509 = vunpack.c.l.b16 %v438
    %v510 = vunpack.c.l.b16 %v439
    %v511 = vunpack.c.l.b16 %v440
    %v512 = vunpack.c.l.b16 %v441
    %v513 = vunpack.c.l.b16 %v442
    %v514 = vunpack.c.l.b16 %v443
    %v515 = vunpack.c.l.b16 %v444
    %v516 = vunpack.c.l.b16 %v445
    %v517 = vunpack.c.l.b16 %v446
    %v518 = vunpack.c.l.b16 %v447
    %v519 = vunpack.c.l.b16 %v448
    %v520 = vunpack.c.l.b16 %v449
    %v521 = vpack.c.b16 %v490, %v489
    %v522 = vpack.c.b16 %v492, %v491
    %v523 = vpack.c.b16 %v494, %v493
    %v524 = vpack.c.b16 %v496, %v495
    %v525 = vpack.c.b16 %v498, %v497
    %v526 = vpack.c.b16 %v500, %v499
    %v527 = vpack.c.b16 %v502, %v501
    %v528 = vpack.c.b16 %v504, %v503
    %v529 = vpack.c.b16 %v506, %v505
    %v530 = vpack.c.b16 %v508, %v507
    %v531 = vpack.c.b16 %v510, %v509
    %v532 = vpack.c.b16 %v512, %v511
    %v533 = vpack.c.b16 %v514, %v513
    %v534 = vpack.c.b16 %v516, %v515
    %v535 = vpack.c.b16 %v518, %v517
    %v536 = vpack.c.b16 %v520, %v519
    %553 = vmatprep.subr.bf16.mxu0 0
    %554 = vmatpush1.bf16.msra.mxu0 %v528
    %555 = vmatprep.subr.bf16.mxu0 0
    %556 = vmatpush1.bf16.msra.mxu0 %v527
    %557 = vmatprep.subr.bf16.mxu0 0
    %558 = vmatpush1.bf16.msra.mxu0 %v526
    %559 = vmatprep.subr.bf16.mxu0 0
    %560 = vmatpush1.bf16.msra.mxu0 %v525
    %561 = vmatprep.subr.bf16.mxu0 0
    %562 = vmatpush1.bf16.msra.mxu0 %v524
    %563 = vmatprep.subr.bf16.mxu0 0
    %564 = vmatpush1.bf16.msra.mxu0 %v523
    %565 = vmatprep.subr.bf16.mxu0 0
    %566 = vmatpush1.bf16.msra.mxu0 %v522
    %567 = vmatprep.subr.bf16.mxu0 0
    %568 = vmatpush1.bf16.msra.mxu0 %v521
    %569 = vmatprep.subr.bf16.mxu0 0
    %570 = vmatpush2.bf16.msra.mxu0 %v536
    %571 = vmatprep.subr.bf16.mxu0 0
    %572 = vmatpush2.bf16.msra.mxu0 %v535
    %573 = vmatprep.subr.bf16.mxu0 0
    %574 = vmatpush2.bf16.msra.mxu0 %v534
    %575 = vmatprep.subr.bf16.mxu0 0
    %576 = vmatpush2.bf16.msra.mxu0 %v533
    %577 = vmatprep.subr.bf16.mxu0 0
    %578 = vmatpush2.bf16.msra.mxu0 %v532
    %579 = vmatprep.subr.bf16.mxu0 0
    %580 = vmatpush2.bf16.msra.mxu0 %v531
    %581 = vmatprep.subr.bf16.mxu0 0
    %582 = vmatpush2.bf16.msra.mxu0 %v530
    %583 = vmatprep.subr.bf16.mxu0 0
    %584 = vmatpush2.bf16.msra.mxu0 %v529
    %585 = vmatprep.mubr.bf16.mxu0 %v417
    %586 = vmatmul.mubr.bf16.gmra.mxu0 %v416
    %v587 = vpop.f32.mrf.mxu0
    %v588 = vadd.f32 %v455, %v587
    %v589 = vpop.f32.mrf.mxu0
    %v590 = vpop.f32.mrf.mxu0
    %v591 = vadd.f32 %v455, %v590
    %v592 = vpop.f32.mrf.mxu0
    %593 = vdwg.mxu0
    %v594 = vmax.f32 %v588, 0.0
    %v595 = vmax.f32 %v591, 0.0
    %v596 = vpack.c.bf16 %v595, %v594
    %v597 = vld [vmem:[%s8] sm:$0xf]
    %v598 = vld [vmem:[%s8 + $0x4] sm:$0xf]
    %v599 = vld [vmem:[%s8 + $0x8] sm:$0xf]
    %v600 = vld [vmem:[%s8 + $0xc] sm:$0xf]
    %v601 = vld [vmem:[%s8 + $0x10] sm:$0xf]
    %v602 = vld [vmem:[%s8 + $0x14] sm:$0xf]
    %v603 = vld [vmem:[%s8 + $0x18] sm:$0xf]
    %v604 = vld [vmem:[%s8 + $0x1c] sm:$0xf]
    %v605 = vld [vmem:[%s8 + $0x20] sm:$0xf]
    %v606 = vld [vmem:[%s8 + $0x24] sm:$0xf]
    %v607 = vld [vmem:[%s8 + $0x28] sm:$0xf]
    %v608 = vld [vmem:[%s8 + $0x2c] sm:$0xf]
    %v609 = vld [vmem:[%s8 + $0x30] sm:$0xf]
    %v610 = vld [vmem:[%s8 + $0x34] sm:$0xf]
    %v611 = vld [vmem:[%s8 + $0x38] sm:$0xf]
    %v612 = vld [vmem:[%s8 + $0x3c] sm:$0xf]
    %v613 = vld [vmem:[#allocation13] sm:$0x1]
    %v615 = vlaneseq
    %v616 = vshrl.u32 %v615, 7
    %v617 = vsub.s32 0, %v616
    %v618 = vrot.slane %v613, %v617
    %v636 = vunpack.c.l.b16 %v597
    %v637 = vunpack.c.l.b16 %v598
    %v638 = vunpack.c.l.b16 %v599
    %v639 = vunpack.c.l.b16 %v600
    %v640 = vunpack.c.l.b16 %v601
    %v641 = vunpack.c.l.b16 %v602
    %v642 = vunpack.c.l.b16 %v603
    %v643 = vunpack.c.l.b16 %v604
    %v644 = vunpack.c.l.b16 %v605
    %v645 = vunpack.c.l.b16 %v606
    %v646 = vunpack.c.l.b16 %v607
    %v647 = vunpack.c.l.b16 %v608
    %v648 = vunpack.c.l.b16 %v609
    %v649 = vunpack.c.l.b16 %v610
    %v650 = vunpack.c.l.b16 %v611
    %v651 = vunpack.c.l.b16 %v612
    %v652 = vpack.c.b16 %v637, %v636
    %v653 = vpack.c.b16 %v639, %v638
    %v654 = vpack.c.b16 %v641, %v640
    %v655 = vpack.c.b16 %v643, %v642
    %v656 = vpack.c.b16 %v645, %v644
    %v657 = vpack.c.b16 %v647, %v646
    %v658 = vpack.c.b16 %v649, %v648
    %v659 = vpack.c.b16 %v651, %v650
    %668 = vmatprep.subr.bf16.mxu0 0
    %669 = vmatpush1.bf16.msra.mxu0 %v659
    %670 = vmatprep.subr.bf16.mxu0 0
    %671 = vmatpush1.bf16.msra.mxu0 %v658
    %672 = vmatprep.subr.bf16.mxu0 0
    %673 = vmatpush1.bf16.msra.mxu0 %v657
    %674 = vmatprep.subr.bf16.mxu0 0
    %675 = vmatpush1.bf16.msra.mxu0 %v656
    %676 = vmatprep.subr.bf16.mxu0 0
    %677 = vmatpush1.bf16.msra.mxu0 %v655
    %678 = vmatprep.subr.bf16.mxu0 0
    %679 = vmatpush1.bf16.msra.mxu0 %v654
    %680 = vmatprep.subr.bf16.mxu0 0
    %681 = vmatpush1.bf16.msra.mxu0 %v653
    %682 = vmatprep.subr.bf16.mxu0 0
    %683 = vmatpush1.bf16.msra.mxu0 %v652
    %684 = vmatprep.subr.bf16.mxu0 0
    %685 = vmatpush2.bf16.msra.mxu0 0
    %686 = vmatprep.subr.bf16.mxu0 0
    %687 = vmatpush2.bf16.msra.mxu0 0
    %688 = vmatprep.subr.bf16.mxu0 0
    %689 = vmatpush2.bf16.msra.mxu0 0
    %690 = vmatprep.subr.bf16.mxu0 0
    %691 = vmatpush2.bf16.msra.mxu0 0
    %692 = vmatprep.subr.bf16.mxu0 0
    %693 = vmatpush2.bf16.msra.mxu0 0
    %694 = vmatprep.subr.bf16.mxu0 0
    %695 = vmatpush2.bf16.msra.mxu0 0
    %696 = vmatprep.subr.bf16.mxu0 0
    %697 = vmatpush2.bf16.msra.mxu0 0
    %698 = vmatprep.subr.bf16.mxu0 0
    %699 = vmatpush2.bf16.msra.mxu0 0
    %700 = vmatprep.mubr.bf16.mxu0 0
    %701 = vmatmul.mubr.bf16.gmra.mxu0 %v596
    %v702 = vpop.f32.mrf.mxu0
    %v703 = vadd.f32 %v618, %v702
    %v704 = vpop.f32.mrf.mxu0
    %v705 = vpop.f32.mrf.mxu0
    %v706 = vadd.f32 %v618, %v705
    %v707 = vpop.f32.mrf.mxu0
    %708 = vdwg.mxu0
    %v709 = vmax.f32 %v703, 0.0
    %v710 = vmax.f32 %v706, 0.0
    %v711 = vpack.c.bf16 %v710, %v709
    %v712 = vld [vmem:[#allocation14] sm:$0xf]
    %v713 = vld [vmem:[#allocation14 + $0x4] sm:$0xf]
    %v714 = vld [vmem:[#allocation14 + $0x8] sm:$0xf]
    %v715 = vld [vmem:[#allocation14 + $0xc] sm:$0xf]
    %v716 = vld [vmem:[#allocation14 + $0x10] sm:$0xf]
    %v717 = vld [vmem:[#allocation14 + $0x14] sm:$0xf]
    %v718 = vld [vmem:[#allocation14 + $0x18] sm:$0xf]
    %v719 = vld [vmem:[#allocation14 + $0x1c] sm:$0xf]
    %v720 = vld [vmem:[#allocation14 + $0x20] sm:$0xf]
    %v721 = vld [vmem:[#allocation14 + $0x24] sm:$0xf]
    %v722 = vld [vmem:[#allocation14 + $0x28] sm:$0xf]
    %v723 = vld [vmem:[#allocation14 + $0x2c] sm:$0xf]
    %v724 = vld [vmem:[#allocation14 + $0x30] sm:$0xf]
    %v725 = vld [vmem:[#allocation14 + $0x34] sm:$0xf]
    %v726 = vld [vmem:[#allocation14 + $0x38] sm:$0xf]
    %v727 = vld [vmem:[#allocation14 + $0x3c] sm:$0xf]
    %v728 = vld [vmem:[%s11] sm:$0x1]
    %v730 = vlaneseq
    %v731 = vshrl.u32 %v730, 7
    %v732 = vsub.s32 0, %v731
    %v733 = vrot.slane %v728, %v732
    %v751 = vunpack.c.l.b16 %v712
    %v752 = vunpack.c.l.b16 %v713
    %v753 = vunpack.c.l.b16 %v714
    %v754 = vunpack.c.l.b16 %v715
    %v755 = vunpack.c.l.b16 %v716
    %v756 = vunpack.c.l.b16 %v717
    %v757 = vunpack.c.l.b16 %v718
    %v758 = vunpack.c.l.b16 %v719
    %v759 = vunpack.c.l.b16 %v720
    %v760 = vunpack.c.l.b16 %v721
    %v761 = vunpack.c.l.b16 %v722
    %v762 = vunpack.c.l.b16 %v723
    %v763 = vunpack.c.l.b16 %v724
    %v764 = vunpack.c.l.b16 %v725
    %v765 = vunpack.c.l.b16 %v726
    %v766 = vunpack.c.l.b16 %v727
    %v767 = vpack.c.b16 %v752, %v751
    %v768 = vpack.c.b16 %v754, %v753
    %v769 = vpack.c.b16 %v756, %v755
    %v770 = vpack.c.b16 %v758, %v757
    %v771 = vpack.c.b16 %v760, %v759
    %v772 = vpack.c.b16 %v762, %v761
    %v773 = vpack.c.b16 %v764, %v763
    %v774 = vpack.c.b16 %v766, %v765
    %783 = vmatprep.subr.bf16.mxu0 0
    %784 = vmatpush1.bf16.msra.mxu0 %v774
    %785 = vmatprep.subr.bf16.mxu0 0
    %786 = vmatpush1.bf16.msra.mxu0 %v773
    %787 = vmatprep.subr.bf16.mxu0 0
    %788 = vmatpush1.bf16.msra.mxu0 %v772
    %789 = vmatprep.subr.bf16.mxu0 0
    %790 = vmatpush1.bf16.msra.mxu0 %v771
    %791 = vmatprep.subr.bf16.mxu0 0
    %792 = vmatpush1.bf16.msra.mxu0 %v770
    %793 = vmatprep.subr.bf16.mxu0 0
    %794 = vmatpush1.bf16.msra.mxu0 %v769
    %795 = vmatprep.subr.bf16.mxu0 0
    %796 = vmatpush1.bf16.msra.mxu0 %v768
    %797 = vmatprep.subr.bf16.mxu0 0
    %798 = vmatpush1.bf16.msra.mxu0 %v767
    %799 = vmatprep.subr.bf16.mxu0 0
    %800 = vmatpush2.bf16.msra.mxu0 0
    %801 = vmatprep.subr.bf16.mxu0 0
    %802 = vmatpush2.bf16.msra.mxu0 0
    %803 = vmatprep.subr.bf16.mxu0 0
    %804 = vmatpush2.bf16.msra.mxu0 0
    %805 = vmatprep.subr.bf16.mxu0 0
    %806 = vmatpush2.bf16.msra.mxu0 0
    %807 = vmatprep.subr.bf16.mxu0 0
    %808 = vmatpush2.bf16.msra.mxu0 0
    %809 = vmatprep.subr.bf16.mxu0 0
    %810 = vmatpush2.bf16.msra.mxu0 0
    %811 = vmatprep.subr.bf16.mxu0 0
    %812 = vmatpush2.bf16.msra.mxu0 0
    %813 = vmatprep.subr.bf16.mxu0 0
    %814 = vmatpush2.bf16.msra.mxu0 0
    %815 = vmatprep.mubr.bf16.mxu0 0
    %816 = vmatmul.mubr.bf16.gmra.mxu0 %v711
    %v817 = vpop.f32.mrf.mxu0
    %v818 = vadd.f32 %v733, %v817
    %v819 = vpop.f32.mrf.mxu0
    %v820 = vpop.f32.mrf.mxu0
    %v821 = vadd.f32 %v733, %v820
    %v822 = vpop.f32.mrf.mxu0
    %823 = vdwg.mxu0
    %v824 = vmax.f32 %v818, 0.0
    %v825 = vmax.f32 %v821, 0.0
    %v826 = vpack.c.bf16 %v825, %v824
    %v827 = vld [vmem:[%s12] sm:$0xf]
    %v828 = vld [vmem:[%s12 + $0x4] sm:$0xf]
    %v829 = vld [vmem:[%s12 + $0x8] sm:$0xf]
    %v830 = vld [vmem:[%s12 + $0xc] sm:$0xf]
    %v831 = vld [vmem:[%s12 + $0x10] sm:$0xf]
    %v832 = vld [vmem:[%s12 + $0x14] sm:$0xf]
    %v833 = vld [vmem:[%s12 + $0x18] sm:$0xf]
    %v834 = vld [vmem:[%s12 + $0x1c] sm:$0xf]
    %v835 = vld [vmem:[%s12 + $0x20] sm:$0xf]
    %v836 = vld [vmem:[%s12 + $0x24] sm:$0xf]
    %v837 = vld [vmem:[%s12 + $0x28] sm:$0xf]
    %v838 = vld [vmem:[%s12 + $0x2c] sm:$0xf]
    %v839 = vld [vmem:[%s12 + $0x30] sm:$0xf]
    %v840 = vld [vmem:[%s12 + $0x34] sm:$0xf]
    %v841 = vld [vmem:[%s12 + $0x38] sm:$0xf]
    %v842 = vld [vmem:[%s12 + $0x3c] sm:$0xf]
    %v843 = vld [vmem:[%s13] sm:$0x1]
    %v845 = vlaneseq
    %v846 = vshrl.u32 %v845, 7
    %v847 = vsub.s32 0, %v846
    %v848 = vrot.slane %v843, %v847
    %v866 = vunpack.c.l.b16 %v827
    %v867 = vunpack.c.l.b16 %v828
    %v868 = vunpack.c.l.b16 %v829
    %v869 = vunpack.c.l.b16 %v830
    %v870 = vunpack.c.l.b16 %v831
    %v871 = vunpack.c.l.b16 %v832
    %v872 = vunpack.c.l.b16 %v833
    %v873 = vunpack.c.l.b16 %v834
    %v874 = vunpack.c.l.b16 %v835
    %v875 = vunpack.c.l.b16 %v836
    %v876 = vunpack.c.l.b16 %v837
    %v877 = vunpack.c.l.b16 %v838
    %v878 = vunpack.c.l.b16 %v839
    %v879 = vunpack.c.l.b16 %v840
    %v880 = vunpack.c.l.b16 %v841
    %v881 = vunpack.c.l.b16 %v842
    %v882 = vpack.c.b16 %v867, %v866
    %v883 = vpack.c.b16 %v869, %v868
    %v884 = vpack.c.b16 %v871, %v870
    %v885 = vpack.c.b16 %v873, %v872
    %v886 = vpack.c.b16 %v875, %v874
    %v887 = vpack.c.b16 %v877, %v876
    %v888 = vpack.c.b16 %v879, %v878
    %v889 = vpack.c.b16 %v881, %v880
    %898 = vmatprep.subr.bf16.mxu0 0
    %899 = vmatpush1.bf16.msra.mxu0 %v889
    %900 = vmatprep.subr.bf16.mxu0 0
    %901 = vmatpush1.bf16.msra.mxu0 %v888
    %902 = vmatprep.subr.bf16.mxu0 0
    %903 = vmatpush1.bf16.msra.mxu0 %v887
    %904 = vmatprep.subr.bf16.mxu0 0
    %905 = vmatpush1.bf16.msra.mxu0 %v886
    %906 = vmatprep.subr.bf16.mxu0 0
    %907 = vmatpush1.bf16.msra.mxu0 %v885
    %908 = vmatprep.subr.bf16.mxu0 0
    %909 = vmatpush1.bf16.msra.mxu0 %v884
    %910 = vmatprep.subr.bf16.mxu0 0
    %911 = vmatpush1.bf16.msra.mxu0 %v883
    %912 = vmatprep.subr.bf16.mxu0 0
    %913 = vmatpush1.bf16.msra.mxu0 %v882
    %914 = vmatprep.subr.bf16.mxu0 0
    %915 = vmatpush2.bf16.msra.mxu0 0
    %916 = vmatprep.subr.bf16.mxu0 0
    %917 = vmatpush2.bf16.msra.mxu0 0
    %918 = vmatprep.subr.bf16.mxu0 0
    %919 = vmatpush2.bf16.msra.mxu0 0
    %920 = vmatprep.subr.bf16.mxu0 0
    %921 = vmatpush2.bf16.msra.mxu0 0
    %922 = vmatprep.subr.bf16.mxu0 0
    %923 = vmatpush2.bf16.msra.mxu0 0
    %924 = vmatprep.subr.bf16.mxu0 0
    %925 = vmatpush2.bf16.msra.mxu0 0
    %926 = vmatprep.subr.bf16.mxu0 0
    %927 = vmatpush2.bf16.msra.mxu0 0
    %928 = vmatprep.subr.bf16.mxu0 0
    %929 = vmatpush2.bf16.msra.mxu0 0
    %930 = vmatprep.mubr.bf16.mxu0 0
    %931 = vmatmul.mubr.bf16.gmra.mxu0 %v826
    %v932 = vpop.f32.mrf.mxu0
    %v933 = vadd.f32 %v848, %v932
    %v934 = vpop.f32.mrf.mxu0
    %v935 = vpop.f32.mrf.mxu0
    %v936 = vadd.f32 %v848, %v935
    %v937 = vpop.f32.mrf.mxu0
    %938 = vdwg.mxu0
    %vm939 = vcmask 64512
    %940 = vst.msk [vmem:[%s14] sm:$0xff] %vm939, %v933
    %941 = vst.msk [vmem:[%s14 + $0x8] sm:$0xff] %vm939, %v936
    // Predicated region
    $region90: #{tpu_custom_call.1} parent=1 // pred_check
      _
    $region91: #{tpu_custom_call.1} parent=1 // pred_check_branch
      %943 = sbr.rel (0) target = $region93
    $region92: #{tpu_custom_call.1} parent=1 // pred_region
      _
    $region93: #{tpu_custom_call.1} parent=1 // pred_fallthru
      _
    // Predicated region
    $region94: #{tpu_custom_call.1} parent=1 // pred_check
      _
    $region95: #{tpu_custom_call.1} parent=1 // pred_check_branch
      %945 = sbr.rel (0) target = $region97
    $region96: #{tpu_custom_call.1} parent=1 // pred_region
      _
    $region97: #{tpu_custom_call.1} parent=1 // pred_fallthru
      _
    %946 = vsyncpa [#allocation4], 1
    %947 = vsyncpa [#allocation6], 1
    %948 = vsyncpa [#allocation9], 1
    %949 = vsyncpa [#allocation12], 1
    %950 = vsyncpa [#allocation15], 1

</llo_original>
